<compile_context>
chip_gen: v7x
topology: tpu7x:2x2x1
jax: 0.10.0
libtpu: 0.0.40
codegen_flags: <defaults>
</compile_context>

<pallas_src>
import functools
import math

import jax
import jax.numpy as jnp
from jax.experimental import pallas as pl
from jax.experimental.pallas import tpu as pltpu

_MIB = 1024 * 1024


# ------------------------------- kernel ------------------------------------


def _geglu_kernel(x_ref, wx_ref, wg_ref, bx_ref, bg_ref, o_ref,
                  accv_ref, accg_ref, *, tk, nk):
    """One (i, j, k) grid step of out = (x @ Wx + bx) * gelu(x @ Wg + bg)."""
    k = pl.program_id(2)

    @pl.when(k == 0)
    def _():
        # Bias folded into accumulator init: removes the epilogue full-tile
        # add and the separate zero fill.
        accv_ref[...] = jnp.broadcast_to(
            bx_ref[...].astype(jnp.float32), accv_ref.shape)
        accg_ref[...] = jnp.broadcast_to(
            bg_ref[...].astype(jnp.float32), accg_ref.shape)

    # x is resident across the j/k axes (block = (tm, dim_in)); slice the
    # current K chunk in-kernel so x is DMA'd from HBM once per M tile.
    if nk == 1:
        x = x_ref[...]
    else:
        start = k * tk
        if tk % 128 == 0:
            start = pl.multiple_of(start, 128)
        x = x_ref[:, pl.ds(start, tk)]

    accv_ref[...] += jnp.dot(x, wx_ref[...],
                             preferred_element_type=jnp.float32)
    accg_ref[...] += jnp.dot(x, wg_ref[...],
                             preferred_element_type=jnp.float32)

    @pl.when(k == pl.num_programs(2) - 1)
    def _():
        gate = accg_ref[...]
        # Exact-erf GELU on the f32 accumulator (matches PyTorch F.gelu
        # default); single cast at the final store.
        gelu_gate = 0.5 * gate * (
            1.0 + jax.lax.erf(gate * jnp.float32(0.7071067811865476)))
        o_ref[...] = (accv_ref[...] * gelu_gate).astype(o_ref.dtype)


# ---------------------------- tiling helpers --------------------------------


def _round_up(x, m):
    return ((x + m - 1) // m) * m


def _cdiv(a, b):
    return (a + b - 1) // b


def _vmem_capacity_bytes():
    try:
        return int(pltpu.get_tpu_info().vmem_capacity_bytes)
    except Exception:
        return 64 * _MIB  # conservative fallback (v7x: 64 MiB; v5e/v6e: 128)


def _pick_k_tile(dim_in, desired):
    desired = min(desired, dim_in)
    if dim_in % desired == 0:
        return desired
    # Prefer 256-multiples (v6e/v7x MXU is 2x256x256), then 128 (v5e 4x128).
    for step in (256, 128):
        t = (desired // step) * step
        while t >= step:
            if dim_in % t == 0:
                return t
            t -= step
    # TODO(synk): pad/mask a final partial K block instead of a single
    # full-dim_in K step for large dim_in with no 128-multiple divisor.
    return dim_in


def _pick_n_tile(dim_out, desired):
    if dim_out <= desired:
        return dim_out
    t = (desired // 256) * 256
    return t if t >= 256 else max(128, (desired // 128) * 128)


def _pick_m_tile(m, desired, granule):
    if m <= desired:
        return _round_up(m, granule)
    return _round_up(desired, granule)


def _vmem_usage(tm, tn, tk, dim_in, xb, wb, ob):
    return (2 * tm * dim_in * xb        # resident x, double-buffered
            + 4 * tk * tn * wb          # wx + wg weight tiles, double-buffered
            + 4 * tn * wb               # biases
            + 2 * tm * tn * ob          # output tile, double-buffered
            + 2 * tm * tn * 4)          # two f32 accumulators (scratch)


def _select_tiles(m, dim_in, dim_out, xb, wb, ob, granule, budget):
    # Large tm pushes arithmetic intensity past the v6e compute/HBM ridge and
    # cuts weight re-streams; large tn/tk cut per-grid-step overhead.
    tm = _pick_m_tile(m, 1024 if m >= 4096 else 512, granule)
    tn = _pick_n_tile(dim_out, 512)
    tk = _pick_k_tile(dim_in, 1024)
    while _vmem_usage(tm, tn, tk, dim_in, xb, wb, ob) > budget:
        x_part = 2 * tm * dim_in * xb
        w_part = 4 * tk * tn * wb
        if x_part >= w_part and tm > granule:
            tm = max(granule, tm // 2)
        elif tn > 128 and dim_out > 128:
            tn = max(128, _round_up(tn // 2, 128))
        elif tk > 256 and dim_in % (tk // 2) == 0:
            tk //= 2
        elif tm > granule:
            tm = max(granule, tm // 2)
        else:
            break
    # v7x has 2 TensorCores: keep >= 2 blocks along a parallel axis when the
    # problem is big enough so megacore sharding has work to split.
    if _cdiv(m, tm) == 1 and _cdiv(dim_out, tn) == 1:
        if dim_out >= 256:
            tn = max(128, _round_up(_cdiv(dim_out, 2), 128))
        elif m >= 2 * granule:
            tm = max(granule, _round_up(_cdiv(m, 2), granule))
    return tm, tn, tk


# ------------------------------- wrappers -----------------------------------


def prepare_geglu_params(w, b, dtype=None):
    """One-time conversion of PyTorch nn.Linear(dim_in, 2*dim_out) params.

    w: (2*dim_out, dim_in)  PyTorch layout;  b: (2*dim_out,)
    Returns (wx, wg, bx, bg): wx/wg (dim_in, dim_out), bx/bg (1, dim_out).
    Pass dtype=jnp.bfloat16 to store weights in the MXU dtype once.
    """
    two_dim_out, _ = w.shape
    dim_out = two_dim_out // 2
    wt = jnp.asarray(w).T                       # (dim_in, 2*dim_out)
    wx = jnp.asarray(wt[:, :dim_out])
    wg = jnp.asarray(wt[:, dim_out:])
    b = jnp.asarray(b)
    bx = b[:dim_out].reshape(1, dim_out)
    bg = b[dim_out:].reshape(1, dim_out)
    if dtype is not None:
        wx, wg = wx.astype(dtype), wg.astype(dtype)
    return wx, wg, bx, bg


@functools.partial(
    jax.jit, static_argnames=("mxu_dtype", "tile_m", "tile_n", "tile_k"))
def geglu(x, wx, wg, bx, bg, *, mxu_dtype=None, tile_m=None, tile_n=None,
          tile_k=None):
    """GEGLU forward with pre-prepared params (see prepare_geglu_params)."""
    *lead, dim_in = x.shape
    dim_out = wx.shape[1]
    m = math.prod(lead) if lead else 1
    out_dtype = x.dtype

    if m == 0 or dim_out == 0:
        return jnp.zeros((*lead, dim_out), dtype=out_dtype)

    if mxu_dtype is not None:
        # bf16 MXU operands: full-rate MXU on v5e/v6e/v7x and half the
        # HBM/VMEM traffic; f32 accumulation is kept inside the kernel.
        x = x.astype(mxu_dtype)
        wx = wx.astype(mxu_dtype)
        wg = wg.astype(mxu_dtype)
    # else: f32 operands are the slow (multi-pass MXU) path.

    x2d = x.reshape(m, dim_in)

    xb = x2d.dtype.itemsize
    wb = wx.dtype.itemsize
    ob = jnp.dtype(out_dtype).itemsize
    granule = max(8, 32 // xb)          # sublane granule: f32->8, bf16->16

    cap = _vmem_capacity_bytes()
    budget = int(cap * 0.55)

    tm, tn, tk = _select_tiles(m, dim_in, dim_out, xb, wb, ob, granule, budget)
    if tile_m is not None:
        tm = tile_m
    if tile_n is not None:
        tn = tile_n
    if tile_k is not None:
        assert dim_in % tile_k == 0, "tile_k must divide dim_in"
        tk = tile_k

    grid_m = _cdiv(m, tm)
    grid_n = _cdiv(dim_out, tn)
    nk = dim_in // tk
    grid = (grid_m, grid_n, nk)

    usage = _vmem_usage(tm, tn, tk, dim_in, xb, wb, ob)
    vmem_limit = int(min(cap * 0.9, max(32 * _MIB, usage * 2)))

    cost = pl.CostEstimate(
        flops=4 * m * dim_in * dim_out + 8 * m * dim_out,
        transcendentals=m * dim_out,
        bytes_accessed=(m * dim_in * xb
                        + 2 * dim_in * dim_out * wb * grid_m
                        + m * dim_out * ob),
    )

    kernel = functools.partial(_geglu_kernel, tk=tk, nk=nk)

    out2d = pl.pallas_call(
        kernel,
        out_shape=jax.ShapeDtypeStruct((m, dim_out), out_dtype),
        grid_spec=pltpu.PrefetchScalarGridSpec(
            num_scalar_prefetch=0,
            grid=grid,
            in_specs=[
                # x resident across j/k: DMA'd from HBM once per M tile.
                pl.BlockSpec((tm, dim_in), lambda i, j, k: (i, 0)),
                pl.BlockSpec((tk, tn), lambda i, j, k: (k, j)),   # W value half
                pl.BlockSpec((tk, tn), lambda i, j, k: (k, j)),   # W gate half
                pl.BlockSpec((1, tn), lambda i, j, k: (0, j)),    # bias value
                pl.BlockSpec((1, tn), lambda i, j, k: (0, j)),    # bias gate
            ],
            out_specs=pl.BlockSpec((tm, tn), lambda i, j, k: (i, j)),
            scratch_shapes=[
                pltpu.VMEM((tm, tn), jnp.float32),   # value accumulator
                pltpu.VMEM((tm, tn), jnp.float32),   # gate accumulator
            ],
        ),
        compiler_params=pltpu.CompilerParams(
            dimension_semantics=("parallel", "parallel", "arbitrary"),
            vmem_limit_bytes=vmem_limit,
        ),
        cost_estimate=cost,
    )(x2d, wx, wg, bx, bg)

    return out2d.reshape(*lead, dim_out)


# ------------------------------ reference -----------------------------------


def _reference_geglu(x, w, b):
    h = jnp.einsum("...i,oi->...o", x, w,
                   precision=jax.lax.Precision.HIGHEST) + b
    dim_out = w.shape[0] // 2
    val, gate = h[..., :dim_out], h[..., dim_out:]
    return val * (0.5 * gate * (1.0 + jax.lax.erf(gate / jnp.sqrt(2.0))))


if __name__ == "__main__":
    key = jax.random.PRNGKey(0)
    kx, kw, kb, kx2, kw2, kb2 = jax.random.split(key, 6)

    # ---- test 1: tiny shapes (matches the module spec sizes) ----
    batch, seq, dim_in, dim_out = 2, 8, 32, 32
    x = jax.random.normal(kx, (batch, seq, dim_in), dtype=jnp.float32)
    bound = 1.0 / math.sqrt(dim_in)
    w = jax.random.uniform(kw, (2 * dim_out, dim_in), minval=-bound,
                           maxval=bound, dtype=jnp.float32)
    b = jax.random.uniform(kb, (2 * dim_out,), minval=-bound, maxval=bound,
                           dtype=jnp.float32)
    wx, wg, bx, bg = prepare_geglu_params(w, b)
    out = jax.block_until_ready(geglu(x, wx, wg, bx, bg))
    ref = _reference_geglu(x, w, b)
    assert out.shape == (batch, seq, dim_out), out.shape
    assert jnp.allclose(out, ref, atol=1e-5, rtol=1e-5), float(
        jnp.max(jnp.abs(out - ref)))

    # ---- test 2: small shapes exercising the full M/N/K grid (partial M/N
    # tiles, multi-step K with in-kernel x slicing) ----
    batch, seq, dim_in, dim_out = 2, 20, 256, 320
    x = jax.random.normal(kx2, (batch, seq, dim_in), dtype=jnp.float32)
    bound = 1.0 / math.sqrt(dim_in)
    w = jax.random.uniform(kw2, (2 * dim_out, dim_in), minval=-bound,
                           maxval=bound, dtype=jnp.float32)
    b = jax.random.uniform(kb2, (2 * dim_out,), minval=-bound, maxval=bound,
                           dtype=jnp.float32)
    wx, wg, bx, bg = prepare_geglu_params(w, b)
    out = jax.block_until_ready(
        geglu(x, wx, wg, bx, bg, tile_m=16, tile_n=128, tile_k=128))
    ref = _reference_geglu(x, w, b)
    assert out.shape == (batch, seq, dim_out), out.shape
    assert jnp.allclose(out, ref, atol=1e-4, rtol=1e-4), float(
        jnp.max(jnp.abs(out - ref)))

    print("KERNEL_OK")
</pallas_src>

<mosaic_0001>
module attributes {stable_mosaic.version = 11 : i64} {
  func.func @_geglu_kernel(%arg0: i32, %arg1: i32, %arg2: i32, %arg3: memref<8x32xf32, #tpu.memory_space<vmem>>, %arg4: memref<32x32xf32, #tpu.memory_space<vmem>>, %arg5: memref<32x32xf32, #tpu.memory_space<vmem>>, %arg6: memref<1x32xf32, #tpu.memory_space<vmem>>, %arg7: memref<1x32xf32, #tpu.memory_space<vmem>>, %arg8: memref<8x32xf32, #tpu.memory_space<vmem>>, %arg9: memref<8x32xf32, #tpu.memory_space<vmem>>, %arg10: memref<8x32xf32, #tpu.memory_space<vmem>>) attributes {dimension_semantics = [#tpu.dimension_semantics<parallel>, #tpu.dimension_semantics<parallel>, #tpu.dimension_semantics<arbitrary>], iteration_bounds = array<i64: 2, 1, 1>, scalar_prefetch = 0 : i64, scratch_operands = 2 : i64, tpu.core_type = #tpu.core_type<tc>, window_params = [{transform_indices = @transform_0, window_bounds = array<i64: 8, 32>}, {transform_indices = @transform_1, window_bounds = array<i64: 32, 32>}, {transform_indices = @transform_2, window_bounds = array<i64: 32, 32>}, {transform_indices = @transform_3, window_bounds = array<i64: 1, 32>}, {transform_indices = @transform_4, window_bounds = array<i64: 1, 32>}, {transform_indices = @transform_5, window_bounds = array<i64: 8, 32>}]} {
    %c0_i32 = arith.constant 0 : i32
    %0 = arith.cmpi eq, %arg2, %c0_i32 : i32
    %1 = arith.extui %0 : i1 to i32
    %c0_i32_0 = arith.constant 0 : i32
    %2 = arith.cmpi ne, %1, %c0_i32_0 : i32
    scf.if %2 {
      %c0_17 = arith.constant 0 : index
      %c0_18 = arith.constant 0 : index
      %17 = vector.load %arg6[%c0_17, %c0_18] : memref<1x32xf32, #tpu.memory_space<vmem>>, vector<1x32xf32>
      %18 = vector.shape_cast %17 : vector<1x32xf32> to vector<1x32xf32>
      %19 = vector.broadcast %18 : vector<1x32xf32> to vector<8x32xf32>
      %c0_19 = arith.constant 0 : index
      %c0_20 = arith.constant 0 : index
      %20 = vector.load %arg9[%c0_19, %c0_20] : memref<8x32xf32, #tpu.memory_space<vmem>>, vector<8x32xf32>
      tpu.vector_store %arg9[%c0_19, %c0_20], %19 {strides = array<i32>} : memref<8x32xf32, #tpu.memory_space<vmem>>, vector<8x32xf32>,
      %c0_21 = arith.constant 0 : index
      %c0_22 = arith.constant 0 : index
      %21 = vector.load %arg7[%c0_21, %c0_22] : memref<1x32xf32, #tpu.memory_space<vmem>>, vector<1x32xf32>
      %22 = vector.shape_cast %21 : vector<1x32xf32> to vector<1x32xf32>
      %23 = vector.broadcast %22 : vector<1x32xf32> to vector<8x32xf32>
      %c0_23 = arith.constant 0 : index
      %c0_24 = arith.constant 0 : index
      %24 = vector.load %arg10[%c0_23, %c0_24] : memref<8x32xf32, #tpu.memory_space<vmem>>, vector<8x32xf32>
      tpu.vector_store %arg10[%c0_23, %c0_24], %23 {strides = array<i32>} : memref<8x32xf32, #tpu.memory_space<vmem>>, vector<8x32xf32>,
    } else {
    }
    %c0 = arith.constant 0 : index
    %c0_1 = arith.constant 0 : index
    %3 = vector.load %arg3[%c0, %c0_1] : memref<8x32xf32, #tpu.memory_space<vmem>>, vector<8x32xf32>
    %c0_2 = arith.constant 0 : index
    %c0_3 = arith.constant 0 : index
    %4 = vector.load %arg9[%c0_2, %c0_3] : memref<8x32xf32, #tpu.memory_space<vmem>>, vector<8x32xf32>
    %c0_4 = arith.constant 0 : index
    %c0_5 = arith.constant 0 : index
    %5 = vector.load %arg4[%c0_4, %c0_5] : memref<32x32xf32, #tpu.memory_space<vmem>>, vector<32x32xf32>
    %cst = arith.constant dense<0.000000e+00> : vector<8x32xf32>
    %6 = tpu.matmul %3, %5, %cst {dimension_numbers = #tpu.dot_dimension_numbers<[1], [0], [0], [1], [0, 0, 1, 1], [], []>} : vector<8x32xf32>, vector<32x32xf32>, vector<8x32xf32> -> vector<8x32xf32>
    %7 = arith.addf %4, %6 : vector<8x32xf32>
    %c0_6 = arith.constant 0 : index
    %c0_7 = arith.constant 0 : index
    %8 = vector.load %arg9[%c0_6, %c0_7] : memref<8x32xf32, #tpu.memory_space<vmem>>, vector<8x32xf32>
    tpu.vector_store %arg9[%c0_6, %c0_7], %7 {strides = array<i32>} : memref<8x32xf32, #tpu.memory_space<vmem>>, vector<8x32xf32>,
    %c0_8 = arith.constant 0 : index
    %c0_9 = arith.constant 0 : index
    %9 = vector.load %arg10[%c0_8, %c0_9] : memref<8x32xf32, #tpu.memory_space<vmem>>, vector<8x32xf32>
    %c0_10 = arith.constant 0 : index
    %c0_11 = arith.constant 0 : index
    %10 = vector.load %arg5[%c0_10, %c0_11] : memref<32x32xf32, #tpu.memory_space<vmem>>, vector<32x32xf32>
    %cst_12 = arith.constant dense<0.000000e+00> : vector<8x32xf32>
    %11 = tpu.matmul %3, %10, %cst_12 {dimension_numbers = #tpu.dot_dimension_numbers<[1], [0], [0], [1], [0, 0, 1, 1], [], []>} : vector<8x32xf32>, vector<32x32xf32>, vector<8x32xf32> -> vector<8x32xf32>
    %12 = arith.addf %9, %11 : vector<8x32xf32>
    %c0_13 = arith.constant 0 : index
    %c0_14 = arith.constant 0 : index
    %13 = vector.load %arg10[%c0_13, %c0_14] : memref<8x32xf32, #tpu.memory_space<vmem>>, vector<8x32xf32>
    tpu.vector_store %arg10[%c0_13, %c0_14], %12 {strides = array<i32>} : memref<8x32xf32, #tpu.memory_space<vmem>>, vector<8x32xf32>,
    %c0_i32_15 = arith.constant 0 : i32
    %14 = arith.cmpi eq, %arg2, %c0_i32_15 : i32
    %15 = arith.extui %14 : i1 to i32
    %c0_i32_16 = arith.constant 0 : i32
    %16 = arith.cmpi ne, %15, %c0_i32_16 : i32
    scf.if %16 {
      %c0_17 = arith.constant 0 : index
      %c0_18 = arith.constant 0 : index
      %17 = vector.load %arg10[%c0_17, %c0_18] : memref<8x32xf32, #tpu.memory_space<vmem>>, vector<8x32xf32>
      %cst_19 = arith.constant 5.000000e-01 : f32
      %18 = vector.broadcast %cst_19 : f32 to vector<8x32xf32>
      %19 = arith.mulf %18, %17 : vector<8x32xf32>
      %cst_20 = arith.constant 0.707106769 : f32
      %20 = vector.broadcast %cst_20 : f32 to vector<8x32xf32>
      %21 = arith.mulf %17, %20 : vector<8x32xf32>
      %22 = math.erf %21 : vector<8x32xf32>
      %cst_21 = arith.constant 1.000000e+00 : f32
      %23 = vector.broadcast %cst_21 : f32 to vector<8x32xf32>
      %24 = arith.addf %23, %22 : vector<8x32xf32>
      %25 = arith.mulf %19, %24 : vector<8x32xf32>
      %c0_22 = arith.constant 0 : index
      %c0_23 = arith.constant 0 : index
      %26 = vector.load %arg9[%c0_22, %c0_23] : memref<8x32xf32, #tpu.memory_space<vmem>>, vector<8x32xf32>
      %27 = arith.mulf %26, %25 : vector<8x32xf32>
      %c0_24 = arith.constant 0 : index
      %c0_25 = arith.constant 0 : index
      %28 = vector.load %arg8[%c0_24, %c0_25] : memref<8x32xf32, #tpu.memory_space<vmem>>, vector<8x32xf32>
      tpu.vector_store %arg8[%c0_24, %c0_25], %27 {strides = array<i32>} : memref<8x32xf32, #tpu.memory_space<vmem>>, vector<8x32xf32>,
    } else {
    }
    return
  }
  func.func @transform_0(%arg0: i32, %arg1: i32, %arg2: i32) -> (i32, i32) {
    %c0_i32 = arith.constant 0 : i32
    %c0_i32_0 = arith.constant 0 : i32
    return %arg0, %c0_i32 : i32, i32
  }
  func.func @transform_1(%arg0: i32, %arg1: i32, %arg2: i32) -> (i32, i32) {
    %c0_i32 = arith.constant 0 : i32
    return %arg2, %arg1 : i32, i32
  }
  func.func @transform_2(%arg0: i32, %arg1: i32, %arg2: i32) -> (i32, i32) {
    %c0_i32 = arith.constant 0 : i32
    return %arg2, %arg1 : i32, i32
  }
  func.func @transform_3(%arg0: i32, %arg1: i32, %arg2: i32) -> (i32, i32) {
    %c0_i32 = arith.constant 0 : i32
    %c0_i32_0 = arith.constant 0 : i32
    return %c0_i32, %arg1 : i32, i32
  }
  func.func @transform_4(%arg0: i32, %arg1: i32, %arg2: i32) -> (i32, i32) {
    %c0_i32 = arith.constant 0 : i32
    %c0_i32_0 = arith.constant 0 : i32
    return %c0_i32, %arg1 : i32, i32
  }
  func.func @transform_5(%arg0: i32, %arg1: i32, %arg2: i32) -> (i32, i32) {
    %c0_i32 = arith.constant 0 : i32
    return %arg0, %arg1 : i32, i32
  }
}

</mosaic_0001>

<llo_original>
// kernel: geglu.1
$region0: #{geglu.1}
  #allocation0 [shape = 'u32[]', space=smem, size = 0x4, offset = 0x4, fixed_abs, tag = 'smem constant byte address 0x4 - core index']
  #allocation1 [shape = 'u32[144,128]{1,0:T(1,128)}', space=vmem, size = 0x12000, scoped, tag = 'internal scratch']
  #allocation2 [shape = 'f32[8,32]{1,0:T(8,128)}', space=vmem, size = 0x1000, scoped, tag = 'scratch operand']
  #allocation3 [shape = 'f32[8,32]{1,0:T(8,128)}', space=vmem, size = 0x1000, scoped, tag = 'scratch operand']
  %s0 = inlined_call_operand.hbm [shape: f32[16,32], index: 0, kind: input, shape index: {}]
  %s1 = inlined_call_operand.hbm [shape: f32[32,32], index: 1, kind: input, shape index: {}]
  %s2 = inlined_call_operand.hbm [shape: f32[32,32], index: 2, kind: input, shape index: {}]
  %s3 = inlined_call_operand.vmem [shape: f32[1,32], index: 3, kind: input, shape index: {}]
  %s4 = inlined_call_operand.vmem [shape: f32[1,32], index: 4, kind: input, shape index: {}]
  %s5 = inlined_call_operand.hbm [shape: f32[16,32], index: 5, kind: output, shape index: {}]
  %s6 = sld [smem:[#allocation0]]
  $region73: #{geglu.1} parent=0
    _
  %s8 = ssub.s32 1, %s6
  %s9 = scalar_select 0, %s8, %s6
  $region1: #{geglu.1} parent=0
    #allocation4 [shape = 'u8[8192]{0}', space=vmem, size = 0x2000, scoped, tag = 'input window, operand 0']
    #allocation5 [shape = 's32[2]{0}', space=sflag, size = 0x8, scoped, tag = 'scoped memory for geglu.1']
    #allocation6 [shape = 's32[2]{0}', space=sflag, size = 0x8, scoped, tag = 'scoped memory for geglu.1']
    #allocation7 [shape = 'u8[16384]{0}', space=vmem, size = 0x4000, scoped, tag = 'input window, operand 1, single buffered']
    #allocation8 [shape = 's32[1]{0}', space=sflag, size = 0x4, scoped, tag = 'scoped memory for geglu.1']
    #allocation9 [shape = 'u8[16384]{0}', space=vmem, size = 0x4000, scoped, tag = 'input window, operand 2, single buffered']
    #allocation10 [shape = 'u8[8192]{0}', space=vmem, size = 0x2000, scoped, tag = 'output window, operand 0']
    %10 = vsyncpa [#allocation5], 0
    %s11 = scalar_lea.sflag [#allocation5], 1
    %12 = vsyncpa %s11, 0
    %13 = vsyncpa [#allocation8], 0
    %14 = vsyncpa [#allocation6], 0
    %s15 = scalar_lea.sflag [#allocation6], 1
    %16 = vsyncpa %s15, 0
    loop: start=0, step=1, limit=4
    $region2: #{geglu.1} parent=1 // loop_pre_header
      _
    $region3: #{geglu.1} parent=1 // loop_header
      %s18 = sphi 0, %s22
      %p19 = scmp.ge.s32.totalorder %s18, 4
      %s25 = sphi 0, %s44
      %s26 = sphi 0, %s40
      %s27 = sphi 0, %s36
      %s28 = sphi 0, %s25
      %s29 = sphi 0, %s26
      %s30 = sphi 0, %s27
      %s31 = sphi 0, %s28
      %s32 = sphi 0, %s29
      %s33 = sphi 0, %s30
      %s47 = sphi 0, %s49
      %s50 = sphi 0, %s47
      %s51 = sphi 0, %s50
      %s67 = sphi 0, %s51
      %s75 = sphi 0, %s77
      %s78 = sphi 0, %s75
      %s79 = sphi 0, %s78
      %s95 = sphi 0, %s79
      %s103 = sphi 0, %s105
      %s106 = sphi 0, %s103
      %s107 = sphi 0, %s106
      %s123 = sphi 0, %s107
      %s129 = sphi 0, %s131
      %s132 = sphi 0, %s129
      %s133 = sphi 0, %s132
      %s149 = sphi 0, %s133
      %s155 = sphi 0, %s157
      %s158 = sphi 0, %s155
      %s159 = sphi 0, %s158
      %s175 = sphi 0, %s159
      %s183 = sphi 0, %s185
      %s186 = sphi 0, %s183
      %s187 = sphi 0, %s186
      %s203 = sphi 0, %s187
    $region4: #{geglu.1} parent=1 // loop_header_branch
      %21 = sbr.rel (%p19) target = $region8
    $region5: #{geglu.1} parent=1 // loop_body
      %s23 = ssub.s32 %s18, 1
      %s24 = ssub.s32 %s18, 2
      %s34 = sadd.s32 1, %s27
      %p35 = scmp.ge.s32.totalorder %s34, 1
      %s36 = scalar_select %p35, 0, %s34
      %s37 = sadd.s32 1, %s26
      %s38 = scalar_select %p35, %s37, %s26
      %p39 = scmp.ge.s32.totalorder %s38, 1
      %s40 = scalar_select %p39, 0, %s38
      %s41 = sadd.s32 1, %s25
      %s42 = scalar_select %p39, %s41, %s25
      %p43 = scmp.ge.s32.totalorder %s42, 2
      %s44 = scalar_select %p43, 0, %s42
      %s45 = ssub.s32 %s25, %s44
      %p46 = scmp.eq.s32.totalorder %s45, 0
      %s48 = sadd.s32 %s47, 1
      %s49 = scalar_select %p46, %s47, %s48
      %p52 = pneg %p46
      %p53 = scmp.eq.s32.totalorder %s18, 1
      %p54 = por %p52, %p53
      %p55 = scmp.ne.s32.totalorder %s47, %s50
      %p56 = scmp.eq.s32.totalorder %s18, 0
      %p57 = por %p55, %p56
      %p58 = scmp.ne.s32.totalorder %s47, %s50
      %p59 = scmp.eq.s32.totalorder %s23, 1
      %p60 = por %p58, %p59
      %p61 = scmp.ne.s32.totalorder %s50, %s51
      %p62 = scmp.eq.s32.totalorder %s23, 0
      %p63 = por %p61, %p62
      %p64 = scmp.ne.s32.totalorder %s50, %s51
      %p65 = scmp.eq.s32.totalorder %s24, 1
      %p66 = por %p64, %p65
      %p68 = scmp.ne.s32.totalorder %s51, %s67
      %p69 = scmp.eq.s32.totalorder %s24, 0
      %p70 = por %p68, %p69
      %s71 = ssub.s32 %s27, %s36
      %s72 = ssub.s32 %s26, %s40
      %s73 = sor.u32 %s71, %s72
      %p74 = scmp.eq.s32.totalorder %s73, 0
      %s76 = sadd.s32 %s75, 1
      %s77 = scalar_select %p74, %s75, %s76
      %p80 = pneg %p74
      %p81 = scmp.eq.s32.totalorder %s18, 1
      %p82 = por %p80, %p81
      %p83 = scmp.ne.s32.totalorder %s75, %s78
      %p84 = scmp.eq.s32.totalorder %s18, 0
      %p85 = por %p83, %p84
      %p86 = scmp.ne.s32.totalorder %s75, %s78
      %p87 = scmp.eq.s32.totalorder %s23, 1
      %p88 = por %p86, %p87
      %p89 = scmp.ne.s32.totalorder %s78, %s79
      %p90 = scmp.eq.s32.totalorder %s23, 0
      %p91 = por %p89, %p90
      %p92 = scmp.ne.s32.totalorder %s78, %s79
      %p93 = scmp.eq.s32.totalorder %s24, 1
      %p94 = por %p92, %p93
      %p96 = scmp.ne.s32.totalorder %s79, %s95
      %p97 = scmp.eq.s32.totalorder %s24, 0
      %p98 = por %p96, %p97
      %s99 = ssub.s32 %s27, %s36
      %s100 = ssub.s32 %s26, %s40
      %s101 = sor.u32 %s99, %s100
      %p102 = scmp.eq.s32.totalorder %s101, 0
      %s104 = sadd.s32 %s103, 1
      %s105 = scalar_select %p102, %s103, %s104
      %p108 = pneg %p102
      %p109 = scmp.eq.s32.totalorder %s18, 1
      %p110 = por %p108, %p109
      %p111 = scmp.ne.s32.totalorder %s103, %s106
      %p112 = scmp.eq.s32.totalorder %s18, 0
      %p113 = por %p111, %p112
      %p114 = scmp.ne.s32.totalorder %s103, %s106
      %p115 = scmp.eq.s32.totalorder %s23, 1
      %p116 = por %p114, %p115
      %p117 = scmp.ne.s32.totalorder %s106, %s107
      %p118 = scmp.eq.s32.totalorder %s23, 0
      %p119 = por %p117, %p118
      %p120 = scmp.ne.s32.totalorder %s106, %s107
      %p121 = scmp.eq.s32.totalorder %s24, 1
      %p122 = por %p120, %p121
      %p124 = scmp.ne.s32.totalorder %s107, %s123
      %p125 = scmp.eq.s32.totalorder %s24, 0
      %p126 = por %p124, %p125
      %s127 = ssub.s32 %s26, %s40
      %p128 = scmp.eq.s32.totalorder %s127, 0
      %s130 = sadd.s32 %s129, 1
      %s131 = scalar_select %p128, %s129, %s130
      %p134 = pneg %p128
      %p135 = scmp.eq.s32.totalorder %s18, 1
      %p136 = por %p134, %p135
      %p137 = scmp.ne.s32.totalorder %s129, %s132
      %p138 = scmp.eq.s32.totalorder %s18, 0
      %p139 = por %p137, %p138
      %p140 = scmp.ne.s32.totalorder %s129, %s132
      %p141 = scmp.eq.s32.totalorder %s23, 1
      %p142 = por %p140, %p141
      %p143 = scmp.ne.s32.totalorder %s132, %s133
      %p144 = scmp.eq.s32.totalorder %s23, 0
      %p145 = por %p143, %p144
      %p146 = scmp.ne.s32.totalorder %s132, %s133
      %p147 = scmp.eq.s32.totalorder %s24, 1
      %p148 = por %p146, %p147
      %p150 = scmp.ne.s32.totalorder %s133, %s149
      %p151 = scmp.eq.s32.totalorder %s24, 0
      %p152 = por %p150, %p151
      %s153 = ssub.s32 %s26, %s40
      %p154 = scmp.eq.s32.totalorder %s153, 0
      %s156 = sadd.s32 %s155, 1
      %s157 = scalar_select %p154, %s155, %s156
      %p160 = pneg %p154
      %p161 = scmp.eq.s32.totalorder %s18, 1
      %p162 = por %p160, %p161
      %p163 = scmp.ne.s32.totalorder %s155, %s158
      %p164 = scmp.eq.s32.totalorder %s18, 0
      %p165 = por %p163, %p164
      %p166 = scmp.ne.s32.totalorder %s155, %s158
      %p167 = scmp.eq.s32.totalorder %s23, 1
      %p168 = por %p166, %p167
      %p169 = scmp.ne.s32.totalorder %s158, %s159
      %p170 = scmp.eq.s32.totalorder %s23, 0
      %p171 = por %p169, %p170
      %p172 = scmp.ne.s32.totalorder %s158, %s159
      %p173 = scmp.eq.s32.totalorder %s24, 1
      %p174 = por %p172, %p173
      %p176 = scmp.ne.s32.totalorder %s159, %s175
      %p177 = scmp.eq.s32.totalorder %s24, 0
      %p178 = por %p176, %p177
      %s179 = ssub.s32 %s25, %s44
      %s180 = ssub.s32 %s26, %s40
      %s181 = sor.u32 %s179, %s180
      %p182 = scmp.eq.s32.totalorder %s181, 0
      %s184 = sadd.s32 %s183, 1
      %s185 = scalar_select %p182, %s183, %s184
      %p188 = pneg %p182
      %p189 = scmp.eq.s32.totalorder %s18, 1
      %p190 = por %p188, %p189
      %p191 = scmp.ne.s32.totalorder %s183, %s186
      %p192 = scmp.eq.s32.totalorder %s18, 0
      %p193 = por %p191, %p192
      %p194 = scmp.ne.s32.totalorder %s183, %s186
      %p195 = scmp.eq.s32.totalorder %s23, 1
      %p196 = por %p194, %p195
      %p197 = scmp.ne.s32.totalorder %s186, %s187
      %p198 = scmp.eq.s32.totalorder %s23, 0
      %p199 = por %p197, %p198
      %p200 = scmp.ne.s32.totalorder %s186, %s187
      %p201 = scmp.eq.s32.totalorder %s24, 1
      %p202 = por %p200, %p201
      %p204 = scmp.ne.s32.totalorder %s187, %s203
      %p205 = scmp.eq.s32.totalorder %s24, 0
      %p206 = por %p204, %p205
      %p207 = scmp.le.s32.totalorder 1, %s18
      %p208 = scmp.lt.s32.totalorder %s18, 3
      %p209 = pnand %p207, %p208
      %p210 = pneg %p209
      // Predicated region
      $region9: #{geglu.1} parent=5 // pred_check
        _
      $region10: #{geglu.1} parent=5 // pred_check_branch
        %212 = sbr.rel (%p209) target = $region12
      $region11: #{geglu.1} parent=5 // pred_region
        %s213 = ssub.s32 %s18, 1
        // Predicated region
        $region13: #{geglu.1} parent=11 // pred_check
          %p214 = pneg %p91
        $region14: #{geglu.1} parent=11 // pred_check_branch
          %216 = sbr.rel (%p214) target = $region16
        $region15: #{geglu.1} parent=11 // pred_region
          %s217 = smul.u32 4, %s30
          %s219 = ssub.s32 512, 512
          %220 = vsyncadd [#allocation8], %s219
          %s221 = sadd.s32 %s29, %s217
          %s222 = smul.addr %s221, 128
          %s223 = scalar_lea.hbm %s1, %s222
          %s224 = sshll.u32 [#allocation7], 4
          %s225 = int_to_ptr.vmem [resolvable:$true] %s224
          %230 = dma.hbm_to_vmem [thread:$0]  %s223, 512, %s225, [#allocation8], 128, 128, 8
        $region16: #{geglu.1} parent=11 // pred_fallthru
          _
        // Predicated region
        $region17: #{geglu.1} parent=11 // pred_check
          %p231 = pneg %p119
        $region18: #{geglu.1} parent=11 // pred_check_branch
          %233 = sbr.rel (%p231) target = $region20
        $region19: #{geglu.1} parent=11 // pred_region
          %s234 = smul.u32 4, %s30
          %s236 = ssub.s32 512, 512
          %237 = vsyncadd [#allocation8], %s236
          %s238 = sadd.s32 %s29, %s234
          %s239 = smul.addr %s238, 128
          %s240 = scalar_lea.hbm %s2, %s239
          %s241 = sshll.u32 [#allocation9], 4
          %s242 = int_to_ptr.vmem [resolvable:$true] %s241
          %247 = dma.hbm_to_vmem [thread:$0]  %s240, 512, %s242, [#allocation8], 128, 128, 8
        $region20: #{geglu.1} parent=11 // pred_fallthru
          _
        // Predicated region
        $region21: #{geglu.1} parent=11 // pred_check
          %p248 = pneg %p145
        $region22: #{geglu.1} parent=11 // pred_check_branch
          %250 = sbr.rel (%p248) target = $region24
        $region23: #{geglu.1} parent=11 // pred_region
          %p251 = scmp.lt.s32.totalorder %s29, 0
          %s252 = scalar_select %p251, %s29, 0
          %s253 = scalar_lea.vmem %s3, %s252
        $region24: #{geglu.1} parent=11 // pred_fallthru
          _
        // Predicated region
        $region25: #{geglu.1} parent=11 // pred_check
          %p254 = pneg %p171
        $region26: #{geglu.1} parent=11 // pred_check_branch
          %256 = sbr.rel (%p254) target = $region28
        $region27: #{geglu.1} parent=11 // pred_region
          %p257 = scmp.lt.s32.totalorder %s29, 0
          %s258 = scalar_select %p257, %s29, 0
          %s259 = scalar_lea.vmem %s4, %s258
        $region28: #{geglu.1} parent=11 // pred_fallthru
          _
      $region12: #{geglu.1} parent=5 // pred_fallthru
        _
      %p260 = scmp.lt.s32.totalorder %s18, 2
      // Predicated region
      $region29: #{geglu.1} parent=5 // pred_check
        %p261 = pneg %p260
      $region30: #{geglu.1} parent=5 // pred_check_branch
        %263 = sbr.rel (%p261) target = $region32
      $region31: #{geglu.1} parent=5 // pred_region
        // Predicated region
        $region33: #{geglu.1} parent=31 // pred_check
          %p264 = pneg %p57
        $region34: #{geglu.1} parent=31 // pred_check_branch
          %266 = sbr.rel (%p264) target = $region36
        $region35: #{geglu.1} parent=31 // pred_region
          %s267 = sand.u32 %s47, 1
          %s268 = scalar_lea.sflag [#allocation5], %s267
          %s269 = sand.u32 %s47, 1
          %s270 = smul.addr %s269, 8
          %s271 = scalar_lea.vmem [#allocation4], %s270
          %s273 = ssub.s32 128, 128
          %274 = vsyncadd %s268, %s273
          %s275 = smul.addr %s25, 128
          %s276 = scalar_lea.hbm %s0, %s275
          %s278 = sshll.u32 %s271, 4
          %s279 = int_to_ptr.vmem [resolvable:$true] %s278
          %281 = dma.hbm_to_vmem [thread:$0]  %s276, 128, %s279, %s268
        $region36: #{geglu.1} parent=31 // pred_fallthru
          _
      $region32: #{geglu.1} parent=5 // pred_fallthru
        _
      %p282 = scmp.le.s32.totalorder 1, %s18
      %p283 = scmp.lt.s32.totalorder %s18, 3
      %p284 = pnand %p282, %p283
      %p285 = pneg %p284
      // Predicated region
      $region37: #{geglu.1} parent=5 // pred_check
        _
      $region38: #{geglu.1} parent=5 // pred_check_branch
        %287 = sbr.rel (%p284) target = $region40
      $region39: #{geglu.1} parent=5 // pred_region
        %s288 = ssub.s32 %s18, 1
        %s289 = sand.u32 %s50, 1
        %s290 = scalar_lea.sflag [#allocation5], %s289
        %s291 = sand.u32 %s50, 1
        %s292 = smul.addr %s291, 8
        %s293 = scalar_lea.vmem [#allocation4], %s292
        // Predicated region
        $region41: #{geglu.1} parent=39 // pred_check
          %p294 = pneg %p63
        $region42: #{geglu.1} parent=39 // pred_check_branch
          %296 = sbr.rel (%p294) target = $region44
        $region43: #{geglu.1} parent=39 // pred_region
          %297 = dma.done %s290, 128
        $region44: #{geglu.1} parent=39 // pred_fallthru
          _
        // Predicated region
        $region45: #{geglu.1} parent=39 // pred_check
          %p298 = pneg %p91
        $region46: #{geglu.1} parent=39 // pred_check_branch
          %300 = sbr.rel (%p298) target = $region48
        $region47: #{geglu.1} parent=39 // pred_region
          %301 = dma.done [#allocation8], 512
        $region48: #{geglu.1} parent=39 // pred_fallthru
          _
        // Predicated region
        $region49: #{geglu.1} parent=39 // pred_check
          %p302 = pneg %p119
        $region50: #{geglu.1} parent=39 // pred_check_branch
          %304 = sbr.rel (%p302) target = $region52
        $region51: #{geglu.1} parent=39 // pred_region
          %305 = dma.done [#allocation8], 512
        $region52: #{geglu.1} parent=39 // pred_fallthru
          _
        %s306 = sand.u32 %s50, 1
        %s307 = scalar_lea.sflag [#allocation5], %s306
        %s308 = sand.u32 %s50, 1
        %s309 = smul.addr %s308, 8
        %s310 = scalar_lea.vmem [#allocation4], %s309
        %p311 = pneg %p63
        %p312 = pneg %p60
        %p313 = pneg %p91
        %p314 = pneg %p88
        %p315 = pneg %p119
        %p316 = pneg %p116
        %p317 = scmp.lt.s32.totalorder %s29, 0
        %s318 = scalar_select %p317, %s29, 0
        %s319 = scalar_lea.vmem %s3, %s318
        %p320 = pneg %p145
        %p321 = pneg %p142
        %p322 = scmp.lt.s32.totalorder %s29, 0
        %s323 = scalar_select %p322, %s29, 0
        %s324 = scalar_lea.vmem %s4, %s323
        %p325 = pneg %p171
        %p326 = pneg %p168
        %p327 = pneg %p199
        %p328 = pneg %p196
        %s329 = sand.u32 %s186, 1
        %s330 = scalar_lea.sflag [#allocation6], %s329
        %s331 = sand.u32 %s186, 1
        %s332 = smul.addr %s331, 8
        %s333 = scalar_lea.vmem [#allocation10], %s332
        %s334 = smul.u32 4, %s30
        %s335 = smul.u32 4, %s30
        %p336 = scmp.lt.s32.totalorder %s29, 0
        %s337 = scalar_select %p336, %s29, 0
        %s338 = scalar_lea.vmem %s3, %s337
        %p339 = scmp.lt.s32.totalorder %s29, 0
        %s340 = scalar_select %p339, %s29, 0
        %s341 = scalar_lea.vmem %s4, %s340
        %p342 = scmp.eq.s32.totalorder %s30, 0
        // Predicated region
        $region53: #{geglu.1} parent=39 // pred_check
          %p343 = pneg %p342
        $region54: #{geglu.1} parent=39 // pred_check_branch
          %345 = sbr.rel (%p343) target = $region56
        $region55: #{geglu.1} parent=39 // pred_region
          %v346 = vld [vmem:[%s338] sm:$0x1]
          %v348 = vlaneseq
          %v349 = vshrl.u32 %v348, 7
          %v350 = vsub.s32 0, %v349
          %v351 = vrot.slane %v346, %v350
          %vm353 = vcmask 261120
          %354 = vst.msk [vmem:[#allocation2] sm:$0xff] %vm353, %v351
          %v355 = vld [vmem:[%s341] sm:$0x1]
          %v357 = vlaneseq
          %v358 = vshrl.u32 %v357, 7
          %v359 = vsub.s32 0, %v358
          %v360 = vrot.slane %v355, %v359
          %362 = vst.msk [vmem:[#allocation3] sm:$0xff] %vm353, %v360
        $region56: #{geglu.1} parent=39 // pred_fallthru
          _
        %v363 = vld [vmem:[%s293] sm:$0xff]
        %v364 = vld [vmem:[#allocation2] sm:$0xff]
        %v365 = vld [vmem:[#allocation7] sm:$0xff]
        %v366 = vld [vmem:[#allocation7 + $0x8] sm:$0xff]
        %v367 = vld [vmem:[#allocation7 + $0x10] sm:$0xff]
        %v368 = vld [vmem:[#allocation7 + $0x18] sm:$0xff]
        %vm369 = vcmask 261120
        %v371 = vsel %vm369, %v363, 0
        %373 = vmatprep.subr.mxu0 0.0
        %374 = vmatpush1.msra.mxu0 %v365
        %375 = vmatprep.subr.mxu0 0.0
        %376 = vmatpush1.msra.mxu0 %v366
        %377 = vmatprep.subr.mxu0 0.0
        %378 = vmatpush1.msra.mxu0 %v367
        %379 = vmatprep.subr.mxu0 0.0
        %380 = vmatpush1.msra.mxu0 %v368
        %381 = vmatprep.subr.mxu0 0.0
        %382 = vmatpush1.msra.mxu0 0.0
        %383 = vmatprep.subr.mxu0 0.0
        %384 = vmatpush1.msra.mxu0 0.0
        %385 = vmatprep.subr.mxu0 0.0
        %386 = vmatpush1.msra.mxu0 0.0
        %387 = vmatprep.subr.mxu0 0.0
        %388 = vmatpush1.msra.mxu0 0.0
        %389 = vmatprep.subr.mxu0 0.0
        %390 = vmatpush1.msra.mxu0 0.0
        %391 = vmatprep.subr.mxu0 0.0
        %392 = vmatpush1.msra.mxu0 0.0
        %393 = vmatprep.subr.mxu0 0.0
        %394 = vmatpush1.msra.mxu0 0.0
        %395 = vmatprep.subr.mxu0 0.0
        %396 = vmatpush1.msra.mxu0 0.0
        %397 = vmatprep.subr.mxu0 0.0
        %398 = vmatpush1.msra.mxu0 0.0
        %399 = vmatprep.subr.mxu0 0.0
        %400 = vmatpush1.msra.mxu0 0.0
        %401 = vmatprep.subr.mxu0 0.0
        %402 = vmatpush1.msra.mxu0 0.0
        %403 = vmatprep.subr.mxu0 0.0
        %404 = vmatpush1.msra.mxu0 0.0
        %405 = vmatprep.subr.mxu0 0.0
        %406 = vmatpush1.msra.mxu0 0.0
        %407 = vmatprep.subr.mxu0 0.0
        %408 = vmatpush1.msra.mxu0 0.0
        %409 = vmatprep.subr.mxu0 0.0
        %410 = vmatpush1.msra.mxu0 0.0
        %411 = vmatprep.subr.mxu0 0.0
        %412 = vmatpush1.msra.mxu0 0.0
        %413 = vmatprep.subr.mxu0 0.0
        %414 = vmatpush1.msra.mxu0 0.0
        %415 = vmatprep.subr.mxu0 0.0
        %416 = vmatpush1.msra.mxu0 0.0
        %417 = vmatprep.subr.mxu0 0.0
        %418 = vmatpush1.msra.mxu0 0.0
        %419 = vmatprep.subr.mxu0 0.0
        %420 = vmatpush1.msra.mxu0 0.0
        %421 = vmatprep.subr.mxu0 0.0
        %422 = vmatpush1.msra.mxu0 0.0
        %423 = vmatprep.subr.mxu0 0.0
        %424 = vmatpush1.msra.mxu0 0.0
        %425 = vmatprep.subr.mxu0 0.0
        %426 = vmatpush1.msra.mxu0 0.0
        %427 = vmatprep.subr.mxu0 0.0
        %428 = vmatpush1.msra.mxu0 0.0
        %429 = vmatprep.subr.mxu0 0.0
        %430 = vmatpush1.msra.mxu0 0.0
        %431 = vmatprep.subr.mxu0 0.0
        %432 = vmatpush1.msra.mxu0 0.0
        %433 = vmatprep.subr.mxu0 0.0
        %434 = vmatpush1.msra.mxu0 0.0
        %435 = vmatprep.subr.mxu0 0.0
        %436 = vmatpush1.msra.mxu0 0.0
        %437 = vmatprep.mubr.f32.mxu0 0.0
        %438 = vmatmul.mubr.f32.gmra.mrb[0].mxu0 %v371
        %v439 = vpop.f32.mrb[0].mxu0
        %v440 = vadd.f32 0.0, %v439
        %v441 = vpop.f32.mrb[0].mxu0
        %442 = vdwg.mxu0
        %v443 = vadd.f32 %v364, %v440
        %444 = vst.msk [vmem:[#allocation2] sm:$0xff] %vm369, %v443
        %v445 = vld [vmem:[#allocation3] sm:$0xff]
        %v446 = vld [vmem:[#allocation9] sm:$0xff]
        %v447 = vld [vmem:[#allocation9 + $0x8] sm:$0xff]
        %v448 = vld [vmem:[#allocation9 + $0x10] sm:$0xff]
        %v449 = vld [vmem:[#allocation9 + $0x18] sm:$0xff]
        %450 = vmatprep.subr.mxu0 0.0
        %451 = vmatpush1.msra.mxu0 %v446
        %452 = vmatprep.subr.mxu0 0.0
        %453 = vmatpush1.msra.mxu0 %v447
        %454 = vmatprep.subr.mxu0 0.0
        %455 = vmatpush1.msra.mxu0 %v448
        %456 = vmatprep.subr.mxu0 0.0
        %457 = vmatpush1.msra.mxu0 %v449
        %458 = vmatprep.subr.mxu0 0.0
        %459 = vmatpush1.msra.mxu0 0.0
        %460 = vmatprep.subr.mxu0 0.0
        %461 = vmatpush1.msra.mxu0 0.0
        %462 = vmatprep.subr.mxu0 0.0
        %463 = vmatpush1.msra.mxu0 0.0
        %464 = vmatprep.subr.mxu0 0.0
        %465 = vmatpush1.msra.mxu0 0.0
        %466 = vmatprep.subr.mxu0 0.0
        %467 = vmatpush1.msra.mxu0 0.0
        %468 = vmatprep.subr.mxu0 0.0
        %469 = vmatpush1.msra.mxu0 0.0
        %470 = vmatprep.subr.mxu0 0.0
        %471 = vmatpush1.msra.mxu0 0.0
        %472 = vmatprep.subr.mxu0 0.0
        %473 = vmatpush1.msra.mxu0 0.0
        %474 = vmatprep.subr.mxu0 0.0
        %475 = vmatpush1.msra.mxu0 0.0
        %476 = vmatprep.subr.mxu0 0.0
        %477 = vmatpush1.msra.mxu0 0.0
        %478 = vmatprep.subr.mxu0 0.0
        %479 = vmatpush1.msra.mxu0 0.0
        %480 = vmatprep.subr.mxu0 0.0
        %481 = vmatpush1.msra.mxu0 0.0
        %482 = vmatprep.subr.mxu0 0.0
        %483 = vmatpush1.msra.mxu0 0.0
        %484 = vmatprep.subr.mxu0 0.0
        %485 = vmatpush1.msra.mxu0 0.0
        %486 = vmatprep.subr.mxu0 0.0
        %487 = vmatpush1.msra.mxu0 0.0
        %488 = vmatprep.subr.mxu0 0.0
        %489 = vmatpush1.msra.mxu0 0.0
        %490 = vmatprep.subr.mxu0 0.0
        %491 = vmatpush1.msra.mxu0 0.0
        %492 = vmatprep.subr.mxu0 0.0
        %493 = vmatpush1.msra.mxu0 0.0
        %494 = vmatprep.subr.mxu0 0.0
        %495 = vmatpush1.msra.mxu0 0.0
        %496 = vmatprep.subr.mxu0 0.0
        %497 = vmatpush1.msra.mxu0 0.0
        %498 = vmatprep.subr.mxu0 0.0
        %499 = vmatpush1.msra.mxu0 0.0
        %500 = vmatprep.subr.mxu0 0.0
        %501 = vmatpush1.msra.mxu0 0.0
        %502 = vmatprep.subr.mxu0 0.0
        %503 = vmatpush1.msra.mxu0 0.0
        %504 = vmatprep.subr.mxu0 0.0
        %505 = vmatpush1.msra.mxu0 0.0
        %506 = vmatprep.subr.mxu0 0.0
        %507 = vmatpush1.msra.mxu0 0.0
        %508 = vmatprep.subr.mxu0 0.0
        %509 = vmatpush1.msra.mxu0 0.0
        %510 = vmatprep.subr.mxu0 0.0
        %511 = vmatpush1.msra.mxu0 0.0
        %512 = vmatprep.subr.mxu0 0.0
        %513 = vmatpush1.msra.mxu0 0.0
        %514 = vmatprep.mubr.f32.mxu0 0.0
        %515 = vmatmul.mubr.f32.gmra.mrb[0].mxu0 %v371
        %v516 = vpop.f32.mrb[0].mxu0
        %v517 = vadd.f32 0.0, %v516
        %v518 = vpop.f32.mrb[0].mxu0
        %519 = vdwg.mxu0
        %v520 = vadd.f32 %v445, %v517
        %521 = vst.msk [vmem:[#allocation3] sm:$0xff] %vm369, %v520
        // Predicated region
        $region57: #{geglu.1} parent=39 // pred_check
          %p522 = pneg %p342
        $region58: #{geglu.1} parent=39 // pred_check_branch
          %524 = sbr.rel (%p522) target = $region60
        $region59: #{geglu.1} parent=39 // pred_region
          %v525 = vld [vmem:[#allocation3] sm:$0xff]
          %v526 = vmul.f32 %v525, 0.5
          %v527 = vmul.f32 %v525, 0.70710677
          %v528 = verf.f32.pop %v527
          %v529 = vadd.f32 %v528, 1.0
          %v530 = vmul.f32 %v526, %v529
          %v531 = vld [vmem:[#allocation2] sm:$0xff]
          %v532 = vmul.f32 %v531, %v530
          %533 = vst.msk [vmem:[%s333] sm:$0xff] %vm369, %v532
        $region60: #{geglu.1} parent=39 // pred_fallthru
          _
        %s534 = sand.u32 %s186, 1
        %s535 = scalar_lea.sflag [#allocation6], %s534
        %s536 = sand.u32 %s186, 1
        %s537 = smul.addr %s536, 8
        %s538 = scalar_lea.vmem [#allocation10], %s537
        // Predicated region
        $region61: #{geglu.1} parent=39 // pred_check
          %p539 = pneg %p196
        $region62: #{geglu.1} parent=39 // pred_check_branch
          %541 = sbr.rel (%p539) target = $region64
        $region63: #{geglu.1} parent=39 // pred_region
          %s543 = ssub.s32 128, 128
          %544 = vsyncadd %s535, %s543
          %s545 = sadd.s32 %s29, %s28
          %s546 = smul.addr %s545, 128
          %s547 = scalar_lea.hbm %s5, %s546
          %s549 = sshll.u32 %s538, 4
          %s550 = int_to_ptr.vmem [resolvable:$true] %s549
          %552 = dma.vmem_to_hbm [thread:$0]  %s550, 128, %s547, %s535
        $region64: #{geglu.1} parent=39 // pred_fallthru
          _
      $region40: #{geglu.1} parent=5 // pred_fallthru
        _
      %p553 = scmp.le.s32.totalorder 2, %s18
      // Predicated region
      $region65: #{geglu.1} parent=5 // pred_check
        %p554 = pneg %p553
      $region66: #{geglu.1} parent=5 // pred_check_branch
        %556 = sbr.rel (%p554) target = $region68
      $region67: #{geglu.1} parent=5 // pred_region
        %s557 = ssub.s32 %s18, 2
        // Predicated region
        $region69: #{geglu.1} parent=67 // pred_check
          %p558 = pneg %p202
        $region70: #{geglu.1} parent=67 // pred_check_branch
          %560 = sbr.rel (%p558) target = $region72
        $region71: #{geglu.1} parent=67 // pred_region
          %s561 = sand.u32 %s187, 1
          %s562 = scalar_lea.sflag [#allocation6], %s561
          %s563 = sand.u32 %s187, 1
          %s564 = smul.addr %s563, 8
          %s565 = scalar_lea.vmem [#allocation10], %s564
          %566 = dma.done %s562, 128
        $region72: #{geglu.1} parent=67 // pred_fallthru
          _
      $region68: #{geglu.1} parent=5 // pred_fallthru
        _
    $region6: #{geglu.1} parent=1 // loop_footer
      %s22 = sadd.s32 1, %s18
    $region7: #{geglu.1} parent=1 // loop_footer_branch
      %17 = sbr.rel target = $region3
    $region8: #{geglu.1} parent=1 // loop_exit
      _
    %567 = vsyncpa [#allocation5], 1
    %s568 = scalar_lea.sflag [#allocation5], 1
    %569 = vsyncpa %s568, 1
    %570 = vsyncpa [#allocation8], 1
    %571 = vsyncpa [#allocation6], 1
    %s572 = scalar_lea.sflag [#allocation6], 1
    %573 = vsyncpa %s572, 1

</llo_original>
